<compile_context>
chip_gen: v7x
topology: tpu7x:2x2x1
jax: 0.10.0
libtpu: 0.0.40
codegen_flags: <defaults>
</compile_context>

<pallas_src>
import jax
import jax.numpy as jnp
from jax.experimental import pallas as pl
from jax.experimental.pallas import tpu as pltpu


_LANE = 128
_MIB = 1 << 20
# Conservative total-VMEM budget so the same tiling fits v5e/v6e (128 MiB
# physical) and v7x (64 MiB physical) with headroom for Mosaic scratch.
_VMEM_BUDGET = 48 * _MIB


def _round_up(x, m):
    return ((x + m - 1) // m) * m


def _pick_block(n_p, target):
    """Largest multiple of 128 that divides n_p, is <= target and, when
    possible, leaves >= 2 row blocks (v7x megacore)."""
    units = n_p // _LANE
    cap = max(1, min(target // _LANE, units if units == 1 else units // 2))
    for d in range(cap, 0, -1):
        if units % d == 0:
            return _LANE * d
    return _LANE


def prepare_adj(adj, compute_dtype=jnp.bfloat16):
    """Pad adj to a 128-multiple and cast to the compute dtype ONCE.

    adj is constant across GCN layers / epochs, so doing this outside
    graph_convolution amortizes the pad+cast HBM pass (the aggregation kernel
    is adj-bandwidth-bound).  The returned array can be passed directly as
    the `adj` argument of graph_convolution.
    """
    n = adj.shape[0]
    n_p = _round_up(n, _LANE)
    if n_p == n and adj.dtype == compute_dtype:
        return adj
    return jnp.zeros((n_p, n_p), compute_dtype).at[:n, :n].set(
        adj.astype(compute_dtype))


def _linear_kernel(x_ref, w_ref, b_ref, h_ref):
    # hidden = x @ W_t + b ; W_t pre-transposed in the wrapper (no in-kernel
    # transpose); x is cast to the compute dtype here (no wrapper cast pass).
    xv = x_ref[...].astype(w_ref.dtype)
    h = jnp.dot(xv, w_ref[...], preferred_element_type=jnp.float32)
    h_ref[...] = (h + b_ref[...]).astype(h_ref.dtype)


def _make_aggregate_kernel(blk, hidden_resident):
    def kernel(adj_ref, h_ref, o_ref, acc_ref):
        k = pl.program_id(1)

        @pl.when(k == 0)
        def _():
            acc_ref[...] = jnp.zeros_like(acc_ref)

        # In-kernel bf16 cast of the adj tile (no separate HBM cast pass).
        a = adj_ref[...].astype(h_ref.dtype)
        if hidden_resident:
            h = h_ref[pl.ds(pl.multiple_of(k * blk, _LANE), blk), :]
        else:
            h = h_ref[...]
        acc_ref[...] += jnp.dot(a, h, preferred_element_type=jnp.float32)

        @pl.when(k == pl.num_programs(1) - 1)
        def _():
            # act = ReLU (the module's `act`).
            o_ref[...] = jnp.maximum(acc_ref[...], 0.0).astype(o_ref.dtype)

    return kernel


def graph_convolution(x, adj, weight, bias=None, *, block=1024,
                      compute_dtype=jnp.bfloat16, out_dtype=None):
    """GCN layer forward on TPU via Pallas.

    x:      (N, F_in)      node features
    adj:    (N, N) dense adjacency in any float dtype, OR the pre-padded
            bf16 adjacency returned by prepare_adj (amortized path).
    weight: (F_out, F_in)  nn.Linear layout
    bias:   (F_out,) or None
    Returns (out, adj) with out: (N, F_out), matching the PyTorch forward.
    """
    n, f_in = x.shape
    f_out = weight.shape[0]
    out_dtype = x.dtype if out_dtype is None else out_dtype

    # ---- tiling / padding choices --------------------------------------
    n_p = _round_up(n, _LANE)            # pad only to 128, not to blk
    f_in_p = _round_up(f_in, _LANE)
    f_out_p = _round_up(f_out, _LANE)    # lane-dense output
    blk = _pick_block(n_p, block)

    # ---- adjacency: avoid wrapper-side HBM passes when possible ---------
    if adj.shape[0] == n_p:
        adj_w = adj                      # pre-padded (e.g. via prepare_adj)
    elif adj.shape[0] == n:
        if n_p == n:
            adj_w = adj                  # no padding needed, no copy at all
        else:
            # Pad only; keep dtype (cast happens in-kernel).
            adj_w = jnp.zeros((n_p, n_p), adj.dtype).at[:n, :n].set(adj)
    else:
        raise ValueError("adj must be (N, N) or pre-padded (n_p, n_p)")

    # ---- x / W / bias prep (small next to adj) ---------------------------
    if x.shape == (n_p, f_in_p):
        x_w = x
    else:
        x_w = jnp.zeros((n_p, f_in_p), x.dtype).at[:n, :f_in].set(x)
    w_t = jnp.zeros((f_in_p, f_out_p), compute_dtype).at[:f_in, :f_out].set(
        weight.T.astype(compute_dtype))
    b_p = jnp.zeros((1, f_out_p), jnp.float32)
    if bias is not None:
        b_p = b_p.at[0, :f_out].set(bias.astype(jnp.float32))

    x_isz = jnp.dtype(x.dtype).itemsize
    c_isz = jnp.dtype(compute_dtype).itemsize
    o_isz = jnp.dtype(out_dtype).itemsize
    a_isz = jnp.dtype(adj_w.dtype).itemsize

    # ---- kernel 1: hidden = x @ W_t + b ---------------------------------
    # TODO(synk): add pltpu.prng_seed / prng_random_bits dropout mask here if
    # training-mode parity with F.dropout is ever required (eval = identity).
    # TODO(synk): add a K-tile grid axis here if f_in_p*f_out_p ever grows
    # past ~8-16 MiB (v7x VMEM headroom).
    vmem1 = (2 * blk * f_in_p * x_isz          # x tiles (double-buffered)
             + 2 * f_in_p * f_out_p * c_isz    # resident W_t (budget 2 bufs)
             + 2 * 8 * f_out_p * 4             # bias
             + 2 * blk * f_out_p * c_isz)      # hidden output tiles
    hidden = pl.pallas_call(
        _linear_kernel,
        out_shape=jax.ShapeDtypeStruct((n_p, f_out_p), compute_dtype),
        grid_spec=pltpu.PrefetchScalarGridSpec(
            num_scalar_prefetch=0,
            grid=(n_p // blk,),
            in_specs=[
                pl.BlockSpec((blk, f_in_p), lambda i: (i, 0)),
                pl.BlockSpec((f_in_p, f_out_p), lambda i: (0, 0)),
                pl.BlockSpec((1, f_out_p), lambda i: (0, 0)),
            ],
            out_specs=pl.BlockSpec((blk, f_out_p), lambda i: (i, 0)),
        ),
        compiler_params=pltpu.CompilerParams(
            dimension_semantics=("parallel",),
            vmem_limit_bytes=int(max(vmem1 + 4 * _MIB, 32 * _MIB))),
    )(x_w, w_t, b_p)

    # ---- kernel 2: out = relu(adj @ hidden), tiled row x K grid ---------
    agg_base = (2 * blk * blk * a_isz          # adj tiles (double-buffered)
                + 2 * blk * f_out_p * o_isz    # out tiles
                + blk * f_out_p * 4)           # f32 accumulator scratch
    hidden_full = 2 * n_p * f_out_p * c_isz    # resident hidden (2 bufs, safe)
    hidden_resident = (agg_base + hidden_full) <= _VMEM_BUDGET
    if hidden_resident:
        vmem2 = agg_base + hidden_full
        h_spec = pl.BlockSpec((n_p, f_out_p), lambda i, k: (0, 0))
    else:
        # TODO(synk): also tile f_out for extremely wide outputs that do not
        # even fit the blocked-hidden budget.
        vmem2 = agg_base + 2 * blk * f_out_p * c_isz
        h_spec = pl.BlockSpec((blk, f_out_p), lambda i, k: (k, 0))

    out_p = pl.pallas_call(
        _make_aggregate_kernel(blk, hidden_resident),
        out_shape=jax.ShapeDtypeStruct((n_p, f_out_p), out_dtype),
        grid_spec=pltpu.PrefetchScalarGridSpec(
            num_scalar_prefetch=0,
            grid=(n_p // blk, n_p // blk),
            in_specs=[
                pl.BlockSpec((blk, blk), lambda i, k: (i, k)),
                h_spec,
            ],
            out_specs=pl.BlockSpec((blk, f_out_p), lambda i, k: (i, 0)),
            scratch_shapes=[pltpu.VMEM((blk, f_out_p), jnp.float32)],
        ),
        compiler_params=pltpu.CompilerParams(
            dimension_semantics=("parallel", "arbitrary"),
            vmem_limit_bytes=int(max(vmem2 + 4 * _MIB, 32 * _MIB))),
    )(adj_w, hidden)

    out = out_p[:n, :f_out]
    return out, adj


if __name__ == "__main__":
    key = jax.random.PRNGKey(0)
    k_x, k_adj, k_w, k_b = jax.random.split(key, 4)

    N, F_IN, F_OUT = 16, 32, 32   # toy sizes (benchmark at N >= 2048)

    x = jax.random.normal(k_x, (N, F_IN), dtype=jnp.float32)
    # symmetric-ish dense adjacency with self loops
    a = jax.random.uniform(k_adj, (N, N), dtype=jnp.float32)
    adj = (a + a.T) * 0.5 + jnp.eye(N, dtype=jnp.float32)

    # Deterministic parameters in nn.Linear layout
    weight = jax.random.normal(k_w, (F_OUT, F_IN), dtype=jnp.float32) * 0.1
    bias = jax.random.normal(k_b, (F_OUT,), dtype=jnp.float32) * 0.1

    # Path 1: raw f32 adj (padded once if needed, cast to bf16 in-kernel).
    out, adj_out = graph_convolution(x, adj, weight, bias)
    jax.block_until_ready(out)

    # Path 2: amortized adj (pad + cast once, reuse across layers/epochs).
    adj_prep = prepare_adj(adj)
    out2, _ = graph_convolution(x, adj_prep, weight, bias)
    jax.block_until_ready(out2)

    # Reference in plain f32 JAX; kernel streams bf16 operands with f32
    # accumulation, so expect ~1e-2 relative error.
    ref = jnp.maximum(adj @ (x @ weight.T + bias), 0.0)
    assert out.shape == (N, F_OUT)
    assert adj_out.shape == adj.shape
    assert jnp.allclose(out, ref, atol=5e-2, rtol=5e-2), "mismatch (raw adj)"
    assert jnp.allclose(out2, ref, atol=5e-2, rtol=5e-2), "mismatch (prepared adj)"

    print("KERNEL_OK")
</pallas_src>

<mosaic_0001>
module attributes {stable_mosaic.version = 11 : i64} {
  func.func @_linear_kernel(%arg0: i32, %arg1: memref<128x128xf32, #tpu.memory_space<vmem>>, %arg2: memref<128x128xbf16, #tpu.memory_space<vmem>>, %arg3: memref<1x128xf32, #tpu.memory_space<vmem>>, %arg4: memref<128x128xbf16, #tpu.memory_space<vmem>>) attributes {dimension_semantics = [#tpu.dimension_semantics<parallel>], iteration_bounds = array<i64: 1>, scalar_prefetch = 0 : i64, scratch_operands = 0 : i64, tpu.core_type = #tpu.core_type<tc>, window_params = [{transform_indices = @transform_0, window_bounds = array<i64: 128, 128>}, {pipeline_mode = #tpu.pipeline_mode<synchronous>, transform_indices = @transform_1, window_bounds = array<i64: 128, 128>}, {pipeline_mode = #tpu.pipeline_mode<synchronous>, transform_indices = @transform_2, window_bounds = array<i64: 1, 128>}, {transform_indices = @transform_3, window_bounds = array<i64: 128, 128>}]} {
    %c0 = arith.constant 0 : index
    %c0_0 = arith.constant 0 : index
    %0 = vector.load %arg1[%c0, %c0_0] : memref<128x128xf32, #tpu.memory_space<vmem>>, vector<128x128xf32>
    %1 = arith.truncf %0 : vector<128x128xf32> to vector<128x128xbf16>
    %c0_1 = arith.constant 0 : index
    %c0_2 = arith.constant 0 : index
    %2 = vector.load %arg2[%c0_1, %c0_2] : memref<128x128xbf16, #tpu.memory_space<vmem>>, vector<128x128xbf16>
    %cst = arith.constant dense<0.000000e+00> : vector<128x128xf32>
    %3 = tpu.matmul %1, %2, %cst {dimension_numbers = #tpu.dot_dimension_numbers<[1], [0], [0], [1], [0, 0, 1, 1], [], []>} : vector<128x128xbf16>, vector<128x128xbf16>, vector<128x128xf32> -> vector<128x128xf32>
    %c0_3 = arith.constant 0 : index
    %c0_4 = arith.constant 0 : index
    %4 = vector.load %arg3[%c0_3, %c0_4] : memref<1x128xf32, #tpu.memory_space<vmem>>, vector<1x128xf32>
    %5 = vector.broadcast %4 : vector<1x128xf32> to vector<128x128xf32>
    %6 = arith.addf %3, %5 : vector<128x128xf32>
    %7 = arith.truncf %6 : vector<128x128xf32> to vector<128x128xbf16>
    %c0_5 = arith.constant 0 : index
    %c0_6 = arith.constant 0 : index
    %8 = vector.load %arg4[%c0_5, %c0_6] : memref<128x128xbf16, #tpu.memory_space<vmem>>, vector<128x128xbf16>
    tpu.vector_store %arg4[%c0_5, %c0_6], %7 {strides = array<i32>} : memref<128x128xbf16, #tpu.memory_space<vmem>>, vector<128x128xbf16>,
    return
  }
  func.func @transform_0(%arg0: i32) -> (i32, i32) {
    %c0_i32 = arith.constant 0 : i32
    %c0_i32_0 = arith.constant 0 : i32
    return %arg0, %c0_i32 : i32, i32
  }
  func.func @transform_1(%arg0: i32) -> (i32, i32) {
    %c0_i32 = arith.constant 0 : i32
    %c0_i32_0 = arith.constant 0 : i32
    %c0_i32_1 = arith.constant 0 : i32
    return %c0_i32, %c0_i32_0 : i32, i32
  }
  func.func @transform_2(%arg0: i32) -> (i32, i32) {
    %c0_i32 = arith.constant 0 : i32
    %c0_i32_0 = arith.constant 0 : i32
    %c0_i32_1 = arith.constant 0 : i32
    return %c0_i32, %c0_i32_0 : i32, i32
  }
  func.func @transform_3(%arg0: i32) -> (i32, i32) {
    %c0_i32 = arith.constant 0 : i32
    %c0_i32_0 = arith.constant 0 : i32
    return %arg0, %c0_i32 : i32, i32
  }
}

</mosaic_0001>

<llo_original>
// kernel: tpu_custom_call.1
$region0: #{tpu_custom_call.1}
  #allocation0 [shape = 'u32[]', space=smem, size = 0x4, offset = 0x4, fixed_abs, tag = 'smem constant byte address 0x4 - core index']
  #allocation1 [shape = 'u32[144,128]{1,0:T(1,128)}', space=vmem, size = 0x12000, scoped, tag = 'internal scratch']
  %s0 = inlined_call_operand.hbm [shape: f32[128,128], index: 0, kind: input, shape index: {}]
  %s1 = inlined_call_operand.hbm [shape: bf16[128,128], index: 1, kind: input, shape index: {}]
  %s2 = inlined_call_operand.vmem [shape: f32[1,128], index: 2, kind: input, shape index: {}]
  %s3 = inlined_call_operand.hbm [shape: bf16[128,128], index: 3, kind: output, shape index: {}]
  %s4 = sld [smem:[#allocation0]]
  $region30: #{tpu_custom_call.1} parent=0
    _
  %s6 = ssub.s32 1, %s4
  %s7 = scalar_select 0, %s6, %s4
  $region1: #{tpu_custom_call.1} parent=0
    #allocation2 [shape = 'u8[65536]{0}', space=vmem, size = 0x10000, scoped, tag = 'input window, operand 0, single buffered']
    #allocation3 [shape = 's32[1]{0}', space=sflag, size = 0x4, scoped, tag = 'scoped memory for tpu_custom_call.1']
    #allocation4 [shape = 's32[1]{0}', space=sflag, size = 0x4, scoped, tag = 'scoped memory for tpu_custom_call.1']
    #allocation5 [shape = 'u8[32768]{0}', space=vmem, size = 0x8000, scoped, tag = 'input window, operand 1, single buffered']
    #allocation6 [shape = 's32[1]{0}', space=sflag, size = 0x4, scoped, tag = 'scoped memory for tpu_custom_call.1']
    #allocation7 [shape = 'u8[32768]{0}', space=vmem, size = 0x8000, scoped, tag = 'output window, operand 0, single buffered']
    %8 = vsyncpa [#allocation3], 0
    %9 = vsyncpa [#allocation6], 0
    %10 = vsyncpa [#allocation4], 0
    // Predicated region
    $region2: #{tpu_custom_call.1} parent=1 // pred_check
      _
    $region3: #{tpu_custom_call.1} parent=1 // pred_check_branch
      %12 = sbr.rel (0) target = $region5
    $region4: #{tpu_custom_call.1} parent=1 // pred_region
      %s14 = ssub.s32 2048, 2048
      %15 = vsyncadd [#allocation3], %s14
      %s16 = sshll.u32 [#allocation2], 4
      %s17 = int_to_ptr.vmem [resolvable:$true] %s16
      %22 = dma.hbm_to_vmem [thread:$0]  %s0, 2048, %s17, [#allocation3], 128, 128, 8
    $region5: #{tpu_custom_call.1} parent=1 // pred_fallthru
      _
    // Predicated region
    $region6: #{tpu_custom_call.1} parent=1 // pred_check
      _
    $region7: #{tpu_custom_call.1} parent=1 // pred_check_branch
      %24 = sbr.rel (0) target = $region9
    $region8: #{tpu_custom_call.1} parent=1 // pred_region
      %s26 = ssub.s32 1024, 1024
      %27 = vsyncadd [#allocation6], %s26
      %s28 = sshll.u32 [#allocation5], 4
      %s29 = int_to_ptr.vmem [resolvable:$true] %s28
      %34 = dma.hbm_to_vmem [thread:$0]  %s1, 1024, %s29, [#allocation6], 64, 64, 4
    $region9: #{tpu_custom_call.1} parent=1 // pred_fallthru
      _
    // Predicated region
    $region10: #{tpu_custom_call.1} parent=1 // pred_check
      _
    $region11: #{tpu_custom_call.1} parent=1 // pred_check_branch
      %36 = sbr.rel (0) target = $region13
    $region12: #{tpu_custom_call.1} parent=1 // pred_region
      _
    $region13: #{tpu_custom_call.1} parent=1 // pred_fallthru
      _
    // Predicated region
    $region14: #{tpu_custom_call.1} parent=1 // pred_check
      _
    $region15: #{tpu_custom_call.1} parent=1 // pred_check_branch
      %38 = sbr.rel (0) target = $region17
    $region16: #{tpu_custom_call.1} parent=1 // pred_region
      %39 = dma.done [#allocation3], 2048
    $region17: #{tpu_custom_call.1} parent=1 // pred_fallthru
      _
    // Predicated region
    $region18: #{tpu_custom_call.1} parent=1 // pred_check
      _
    $region19: #{tpu_custom_call.1} parent=1 // pred_check_branch
      %41 = sbr.rel (0) target = $region21
    $region20: #{tpu_custom_call.1} parent=1 // pred_region
      %42 = dma.done [#allocation6], 1024
    $region21: #{tpu_custom_call.1} parent=1 // pred_fallthru
      _
    %v44 = vld [vmem:[#allocation2] sm:$0xff]
    %v45 = vld [vmem:[#allocation2 + $0x8] sm:$0xff]
    %v46 = vld [vmem:[#allocation2 + $0x10] sm:$0xff]
    %v47 = vld [vmem:[#allocation2 + $0x18] sm:$0xff]
    %v48 = vld [vmem:[#allocation2 + $0x20] sm:$0xff]
    %v49 = vld [vmem:[#allocation2 + $0x28] sm:$0xff]
    %v50 = vld [vmem:[#allocation2 + $0x30] sm:$0xff]
    %v51 = vld [vmem:[#allocation2 + $0x38] sm:$0xff]
    %v52 = vld [vmem:[#allocation2 + $0x40] sm:$0xff]
    %v53 = vld [vmem:[#allocation2 + $0x48] sm:$0xff]
    %v54 = vld [vmem:[#allocation2 + $0x50] sm:$0xff]
    %v55 = vld [vmem:[#allocation2 + $0x58] sm:$0xff]
    %v56 = vld [vmem:[#allocation2 + $0x60] sm:$0xff]
    %v57 = vld [vmem:[#allocation2 + $0x68] sm:$0xff]
    %v58 = vld [vmem:[#allocation2 + $0x70] sm:$0xff]
    %v59 = vld [vmem:[#allocation2 + $0x78] sm:$0xff]
    %v60 = vpack.c.bf16 %v45, %v44
    %v61 = vpack.c.bf16 %v47, %v46
    %v62 = vpack.c.bf16 %v49, %v48
    %v63 = vpack.c.bf16 %v51, %v50
    %v64 = vpack.c.bf16 %v53, %v52
    %v65 = vpack.c.bf16 %v55, %v54
    %v66 = vpack.c.bf16 %v57, %v56
    %v67 = vpack.c.bf16 %v59, %v58
    %v68 = vld [vmem:[#allocation5] sm:$0xf]
    %v69 = vld [vmem:[#allocation5 + $0x4] sm:$0xf]
    %v70 = vld [vmem:[#allocation5 + $0x8] sm:$0xf]
    %v71 = vld [vmem:[#allocation5 + $0xc] sm:$0xf]
    %v72 = vld [vmem:[#allocation5 + $0x10] sm:$0xf]
    %v73 = vld [vmem:[#allocation5 + $0x14] sm:$0xf]
    %v74 = vld [vmem:[#allocation5 + $0x18] sm:$0xf]
    %v75 = vld [vmem:[#allocation5 + $0x1c] sm:$0xf]
    %v76 = vld [vmem:[#allocation5 + $0x20] sm:$0xf]
    %v77 = vld [vmem:[#allocation5 + $0x24] sm:$0xf]
    %v78 = vld [vmem:[#allocation5 + $0x28] sm:$0xf]
    %v79 = vld [vmem:[#allocation5 + $0x2c] sm:$0xf]
    %v80 = vld [vmem:[#allocation5 + $0x30] sm:$0xf]
    %v81 = vld [vmem:[#allocation5 + $0x34] sm:$0xf]
    %v82 = vld [vmem:[#allocation5 + $0x38] sm:$0xf]
    %v83 = vld [vmem:[#allocation5 + $0x3c] sm:$0xf]
    %v84 = vld [vmem:[%s2] sm:$0x1]
    %v86 = vlaneseq
    %v87 = vshrl.u32 %v86, 7
    %v88 = vsub.s32 0, %v87
    %v89 = vrot.slane %v84, %v88
    %v107 = vunpack.c.l.b16 %v68
    %v108 = vunpack.c.l.b16 %v69
    %v109 = vunpack.c.l.b16 %v70
    %v110 = vunpack.c.l.b16 %v71
    %v111 = vunpack.c.l.b16 %v72
    %v112 = vunpack.c.l.b16 %v73
    %v113 = vunpack.c.l.b16 %v74
    %v114 = vunpack.c.l.b16 %v75
    %v115 = vunpack.c.l.b16 %v76
    %v116 = vunpack.c.l.b16 %v77
    %v117 = vunpack.c.l.b16 %v78
    %v118 = vunpack.c.l.b16 %v79
    %v119 = vunpack.c.l.b16 %v80
    %v120 = vunpack.c.l.b16 %v81
    %v121 = vunpack.c.l.b16 %v82
    %v122 = vunpack.c.l.b16 %v83
    %v123 = vpack.c.b16 %v108, %v107
    %v124 = vpack.c.b16 %v110, %v109
    %v125 = vpack.c.b16 %v112, %v111
    %v126 = vpack.c.b16 %v114, %v113
    %v127 = vpack.c.b16 %v116, %v115
    %v128 = vpack.c.b16 %v118, %v117
    %v129 = vpack.c.b16 %v120, %v119
    %v130 = vpack.c.b16 %v122, %v121
    %139 = vmatprep.subr.bf16.mxu0 0
    %140 = vmatpush1.bf16.msra.mxu0 %v123
    %141 = vmatprep.subr.bf16.mxu0 0
    %142 = vmatpush1.bf16.msra.mxu0 %v124
    %143 = vmatprep.subr.bf16.mxu0 0
    %144 = vmatpush1.bf16.msra.mxu0 %v125
    %145 = vmatprep.subr.bf16.mxu0 0
    %146 = vmatpush1.bf16.msra.mxu0 %v126
    %147 = vmatprep.subr.bf16.mxu0 0
    %148 = vmatpush1.bf16.msra.mxu0 %v127
    %149 = vmatprep.subr.bf16.mxu0 0
    %150 = vmatpush1.bf16.msra.mxu0 %v128
    %151 = vmatprep.subr.bf16.mxu0 0
    %152 = vmatpush1.bf16.msra.mxu0 %v129
    %153 = vmatprep.subr.bf16.mxu0 0
    %154 = vmatpush1.bf16.msra.mxu0 %v130
    %155 = vmatprep.subr.bf16.mxu0 0
    %156 = vmatpush1.bf16.msra.mxu0 0
    %157 = vmatprep.subr.bf16.mxu0 0
    %158 = vmatpush1.bf16.msra.mxu0 0
    %159 = vmatprep.subr.bf16.mxu0 0
    %160 = vmatpush1.bf16.msra.mxu0 0
    %161 = vmatprep.subr.bf16.mxu0 0
    %162 = vmatpush1.bf16.msra.mxu0 0
    %163 = vmatprep.subr.bf16.mxu0 0
    %164 = vmatpush1.bf16.msra.mxu0 0
    %165 = vmatprep.subr.bf16.mxu0 0
    %166 = vmatpush1.bf16.msra.mxu0 0
    %167 = vmatprep.subr.bf16.mxu0 0
    %168 = vmatpush1.bf16.msra.mxu0 0
    %169 = vmatprep.subr.bf16.mxu0 0
    %170 = vmatpush1.bf16.msra.mxu0 0
    %171 = vmatprep.mubr.bf16.mxu0 0
    %172 = vmatmul.mubr.bf16.gmra.mrb[0].mxu0 %v60
    %v173 = vpop.f32.mrb[0].mxu0
    %v174 = vadd.f32 %v89, %v173
    %v175 = vpop.f32.mrb[0].mxu0
    %v176 = vpop.f32.mrb[0].mxu0
    %v177 = vadd.f32 %v89, %v176
    %v178 = vpop.f32.mrb[0].mxu0
    %179 = vmatprep.mubr.bf16.mxu0 0
    %180 = vmatmul.mubr.bf16.gmra.mrb[0].mxu0 %v61
    %v181 = vpop.f32.mrb[0].mxu0
    %v182 = vadd.f32 %v89, %v181
    %v183 = vpop.f32.mrb[0].mxu0
    %v184 = vpop.f32.mrb[0].mxu0
    %v185 = vadd.f32 %v89, %v184
    %v186 = vpop.f32.mrb[0].mxu0
    %187 = vmatprep.mubr.bf16.mxu0 0
    %188 = vmatmul.mubr.bf16.gmra.mrb[0].mxu0 %v62
    %v189 = vpop.f32.mrb[0].mxu0
    %v190 = vadd.f32 %v89, %v189
    %v191 = vpop.f32.mrb[0].mxu0
    %v192 = vpop.f32.mrb[0].mxu0
    %v193 = vadd.f32 %v89, %v192
    %v194 = vpop.f32.mrb[0].mxu0
    %195 = vmatprep.mubr.bf16.mxu0 0
    %196 = vmatmul.mubr.bf16.gmra.mrb[0].mxu0 %v63
    %v197 = vpop.f32.mrb[0].mxu0
    %v198 = vadd.f32 %v89, %v197
    %v199 = vpop.f32.mrb[0].mxu0
    %v200 = vpop.f32.mrb[0].mxu0
    %v201 = vadd.f32 %v89, %v200
    %v202 = vpop.f32.mrb[0].mxu0
    %203 = vmatprep.mubr.bf16.mxu0 0
    %204 = vmatmul.mubr.bf16.gmra.mrb[0].mxu0 %v64
    %v205 = vpop.f32.mrb[0].mxu0
    %v206 = vadd.f32 %v89, %v205
    %v207 = vpop.f32.mrb[0].mxu0
    %v208 = vpop.f32.mrb[0].mxu0
    %v209 = vadd.f32 %v89, %v208
    %v210 = vpop.f32.mrb[0].mxu0
    %211 = vmatprep.mubr.bf16.mxu0 0
    %212 = vmatmul.mubr.bf16.gmra.mrb[0].mxu0 %v65
    %v213 = vpop.f32.mrb[0].mxu0
    %v214 = vadd.f32 %v89, %v213
    %v215 = vpop.f32.mrb[0].mxu0
    %v216 = vpop.f32.mrb[0].mxu0
    %v217 = vadd.f32 %v89, %v216
    %v218 = vpop.f32.mrb[0].mxu0
    %219 = vmatprep.mubr.bf16.mxu0 0
    %220 = vmatmul.mubr.bf16.gmra.mrb[0].mxu0 %v66
    %v221 = vpop.f32.mrb[0].mxu0
    %v222 = vadd.f32 %v89, %v221
    %v223 = vpop.f32.mrb[0].mxu0
    %v224 = vpop.f32.mrb[0].mxu0
    %v225 = vadd.f32 %v89, %v224
    %v226 = vpop.f32.mrb[0].mxu0
    %227 = vmatprep.mubr.bf16.mxu0 0
    %228 = vmatmul.mubr.bf16.gmra.mrb[0].mxu0 %v67
    %v229 = vpop.f32.mrb[0].mxu0
    %v230 = vadd.f32 %v89, %v229
    %v231 = vpop.f32.mrb[0].mxu0
    %v232 = vpop.f32.mrb[0].mxu0
    %v233 = vadd.f32 %v89, %v232
    %v234 = vpop.f32.mrb[0].mxu0
    %235 = vdwg.mxu0
    %v236 = vpack.c.bf16 %v177, %v174
    %v237 = vpack.c.bf16 %v185, %v182
    %v238 = vpack.c.bf16 %v193, %v190
    %v239 = vpack.c.bf16 %v201, %v198
    %v240 = vpack.c.bf16 %v209, %v206
    %v241 = vpack.c.bf16 %v217, %v214
    %v242 = vpack.c.bf16 %v225, %v222
    %v243 = vpack.c.bf16 %v233, %v230
    %v252 = vunpack.c.l.b16 %v236
    %v253 = vunpack.c.h.b16 %v236
    %v254 = vunpack.c.l.b16 %v237
    %v255 = vunpack.c.h.b16 %v237
    %v256 = vunpack.c.l.b16 %v238
    %v257 = vunpack.c.h.b16 %v238
    %v258 = vunpack.c.l.b16 %v239
    %v259 = vunpack.c.h.b16 %v239
    %v260 = vunpack.c.l.b16 %v240
    %v261 = vunpack.c.h.b16 %v240
    %v262 = vunpack.c.l.b16 %v241
    %v263 = vunpack.c.h.b16 %v241
    %v264 = vunpack.c.l.b16 %v242
    %v265 = vunpack.c.h.b16 %v242
    %v266 = vunpack.c.l.b16 %v243
    %v267 = vunpack.c.h.b16 %v243
    %v268 = vpack.c.b16 %v252, %v252
    %v269 = vpack.c.b16 %v253, %v253
    %v270 = vpack.c.b16 %v254, %v254
    %v271 = vpack.c.b16 %v255, %v255
    %v272 = vpack.c.b16 %v256, %v256
    %v273 = vpack.c.b16 %v257, %v257
    %v274 = vpack.c.b16 %v258, %v258
    %v275 = vpack.c.b16 %v259, %v259
    %v276 = vpack.c.b16 %v260, %v260
    %v277 = vpack.c.b16 %v261, %v261
    %v278 = vpack.c.b16 %v262, %v262
    %v279 = vpack.c.b16 %v263, %v263
    %v280 = vpack.c.b16 %v264, %v264
    %v281 = vpack.c.b16 %v265, %v265
    %v282 = vpack.c.b16 %v266, %v266
    %v283 = vpack.c.b16 %v267, %v267
    %300 = vst [vmem:[#allocation7] sm:$0xf] %v268
    %301 = vst [vmem:[#allocation7 + $0x4] sm:$0xf] %v269
    %302 = vst [vmem:[#allocation7 + $0x8] sm:$0xf] %v270
    %303 = vst [vmem:[#allocation7 + $0xc] sm:$0xf] %v271
    %304 = vst [vmem:[#allocation7 + $0x10] sm:$0xf] %v272
    %305 = vst [vmem:[#allocation7 + $0x14] sm:$0xf] %v273
    %306 = vst [vmem:[#allocation7 + $0x18] sm:$0xf] %v274
    %307 = vst [vmem:[#allocation7 + $0x1c] sm:$0xf] %v275
    %308 = vst [vmem:[#allocation7 + $0x20] sm:$0xf] %v276
    %309 = vst [vmem:[#allocation7 + $0x24] sm:$0xf] %v277
    %310 = vst [vmem:[#allocation7 + $0x28] sm:$0xf] %v278
    %311 = vst [vmem:[#allocation7 + $0x2c] sm:$0xf] %v279
    %312 = vst [vmem:[#allocation7 + $0x30] sm:$0xf] %v280
    %313 = vst [vmem:[#allocation7 + $0x34] sm:$0xf] %v281
    %314 = vst [vmem:[#allocation7 + $0x38] sm:$0xf] %v282
    %315 = vst [vmem:[#allocation7 + $0x3c] sm:$0xf] %v283
    // Predicated region
    $region22: #{tpu_custom_call.1} parent=1 // pred_check
      _
    $region23: #{tpu_custom_call.1} parent=1 // pred_check_branch
      %317 = sbr.rel (0) target = $region25
    $region24: #{tpu_custom_call.1} parent=1 // pred_region
      %s319 = ssub.s32 1024, 1024
      %320 = vsyncadd [#allocation4], %s319
      %s321 = sshll.u32 [#allocation7], 4
      %s322 = int_to_ptr.vmem [resolvable:$true] %s321
      %327 = dma.vmem_to_hbm [thread:$0]  %s322, 1024, %s3, [#allocation4], 64, 64, 4
    $region25: #{tpu_custom_call.1} parent=1 // pred_fallthru
      _
    // Predicated region
    $region26: #{tpu_custom_call.1} parent=1 // pred_check
      _
    $region27: #{tpu_custom_call.1} parent=1 // pred_check_branch
      %329 = sbr.rel (0) target = $region29
    $region28: #{tpu_custom_call.1} parent=1 // pred_region
      %330 = dma.done [#allocation4], 1024
    $region29: #{tpu_custom_call.1} parent=1 // pred_fallthru
      _
    %331 = vsyncpa [#allocation3], 1
    %332 = vsyncpa [#allocation6], 1
    %333 = vsyncpa [#allocation4], 1

</llo_original>
